<compile_context>
chip_gen: v5e
topology: v5e:2x2
jax: 0.10.0
libtpu: 0.0.40
codegen_flags: <defaults>
</compile_context>

<pallas_src>
import functools

import jax
import jax.numpy as jnp
from jax.experimental import pallas as pl
from jax.experimental.pallas import tpu as pltpu


def _round_up(v, m):
    return ((v + m - 1) // m) * m


def _fused_kernel(xc_ref, xe_ref, w_ref, o_ref, xcat_ref, xstk_ref, *, k, wp, cin, tm):
    """Small-Cin path: single MXU GEMM with contraction K = Cin*k*k.

    xc_ref:   (1, cin, tm)      bf16  current flat-input tile
    xe_ref:   (1, cin, nx)      bf16  first nx columns of the next tile (shift spill-over)
    w_ref:    (cout, k*k*cin)   bf16  weight packed as column (kh*k+kw)*cin + ci
    o_ref:    (1, cout, tm)           flat stride-1 conv output tile (lane-dense)
    xcat_ref: (cin, tm+nx)      bf16  scratch: contiguous window for static shifted reads
    xstk_ref: (k*k*cin, tm)     f32   scratch: stacked shifted slices (f32 avoids any
                                      packed-sublane alignment issues for odd Cin)
    """
    xcat_ref[:, :tm] = xc_ref[0]
    xcat_ref[:, tm:] = xe_ref[0]
    for kh in range(k):
        for kw in range(k):
            off = kh * wp + kw                           # static lane shift
            row = (kh * k + kw) * cin                    # static sublane offset
            xstk_ref[row:row + cin, :] = xcat_ref[:, off:off + tm].astype(jnp.float32)
    acc = jnp.dot(w_ref[...], xstk_ref[...].astype(jnp.bfloat16),
                  preferred_element_type=jnp.float32)    # one MXU pass, (cout, tm) f32
    o_ref[0] = jnp.maximum(acc, 0.0).astype(o_ref.dtype)


def _multidot_kernel(xc_ref, xe_ref, w_ref, o_ref, xcat_ref, *, k, wp, tm):
    """Large-Cin path (Cin >= 128): k*k accumulated GEMMs (contraction already deep)."""
    xcat_ref[:, :tm] = xc_ref[0]
    xcat_ref[:, tm:] = xe_ref[0]
    acc = jnp.zeros(o_ref.shape[1:], jnp.float32)
    for kh in range(k):
        for kw in range(k):
            off = kh * wp + kw
            acc += jnp.dot(w_ref[kh * k + kw], xcat_ref[:, off:off + tm],
                           preferred_element_type=jnp.float32)
    o_ref[0] = jnp.maximum(acc, 0.0).astype(o_ref.dtype)


@functools.partial(jax.jit, static_argnames=("stride", "out_dtype"))
def basic_conv_do_eval(x, weight, *, stride=1, out_dtype=None):
    """x: (N, Cin, H, W), weight: (Cout, Cin, k, k). Returns ReLU(conv2d(x, weight))."""
    n, cin, h, w = x.shape
    cout, cin_w, k, k2 = weight.shape
    assert cin_w == cin and k2 == k
    if out_dtype is None:
        out_dtype = x.dtype
    pad = k // 2                        # matches the PyTorch module (kernel_size // 2)

    hp, wp = h + 2 * pad, w + 2 * pad
    ho1, wo1 = hp - k + 1, wp - k + 1   # stride-1 output extents
    m = ho1 * wp                        # flat stride-1 output length (incl. garbage cols)

    # ---- tile geometry ------------------------------------------------------------
    nx = _round_up((k - 1) * (wp + 1), 128)           # columns spilling into the next tile
    # Keep the (Cout, tm) f32 result tile <= ~128 KiB so ReLU + store stay vreg-resident.
    tm_target = max(128, min(2048, ((32768 // max(cout, 1)) // 128) * 128))
    tm = max(nx, (tm_target // nx) * nx)              # tm must be a multiple of nx
    tm = min(tm, _round_up(m, nx))                    # don't exceed the problem size
    m_pad = _round_up(m, tm)
    n_m_tiles = m_pad // tm
    l_pad = m_pad + nx                                # covers the largest shifted read

    # ---- input prep: ONE fused pad+reshape+cast pass over x ------------------------
    extra = max(0, l_pad - hp * wp)
    extra_rows = (extra + wp - 1) // wp
    xf = jnp.pad(x.astype(jnp.bfloat16),
                 ((0, 0), (0, 0), (pad, pad + extra_rows), (pad, pad)))
    xf = xf.reshape(n, cin, (hp + extra_rows) * wp)[:, :, :l_pad]

    # ---- weight prep + kernel selection --------------------------------------------
    fused = cin < 128
    if fused:
        # (Cout, Cin, kh, kw) -> (Cout, kh, kw, Cin) -> (Cout, k*k*Cin), bf16.
        wk = weight.transpose(0, 2, 3, 1).reshape(cout, k * k * cin).astype(jnp.bfloat16)
        kernel = functools.partial(_fused_kernel, k=k, wp=wp, cin=cin, tm=tm)
        w_spec = pl.BlockSpec((cout, k * k * cin), lambda b, mt: (0, 0))
        scratch = [pltpu.VMEM((cin, tm + nx), jnp.bfloat16),
                   pltpu.VMEM((k * k * cin, tm), jnp.float32)]
    else:
        # (Cout, Cin, kh, kw) -> (kh*k+kw, Cout, Cin), bf16.
        wk = weight.transpose(2, 3, 0, 1).reshape(k * k, cout, cin).astype(jnp.bfloat16)
        kernel = functools.partial(_multidot_kernel, k=k, wp=wp, tm=tm)
        w_spec = pl.BlockSpec((k * k, cout, cin), lambda b, mt: (0, 0, 0))
        scratch = [pltpu.VMEM((cin, tm + nx), jnp.bfloat16)]
        # TODO(synk): for very large Cin where 2*Cin*(tm+nx) input blocks no longer fit
        # VMEM, add an innermost "arbitrary" Cin-chunk reduction axis with a scratch acc.

    out_itemsize = jnp.dtype(out_dtype).itemsize
    vmem_need = (2 * cin * tm * 2 + 2 * cin * nx * 2       # double-buffered input tiles
                 + 2 * wk.size * 2                         # double-buffered weight
                 + 2 * cout * tm * out_itemsize            # double-buffered output tile
                 + cin * (tm + nx) * 2                     # xcat scratch
                 + (k * k * cin * tm * 4 if fused else 0)  # slab scratch
                 + cout * tm * 4)                          # result temporaries
    vmem_limit = int(min(max(2 * vmem_need, 32 << 20), 112 << 20))

    out = pl.pallas_call(
        kernel,
        out_shape=jax.ShapeDtypeStruct((n, cout, m_pad), out_dtype),
        grid_spec=pltpu.PrefetchScalarGridSpec(
            num_scalar_prefetch=0,
            grid=(n, n_m_tiles),
            in_specs=[
                # current flat tile (re-fetched once per (b, mt) -> ~1x input HBM traffic)
                pl.BlockSpec((1, cin, tm), lambda b, mt: (b, 0, mt)),
                # first nx columns of the next tile (nx | tm so the block index is exact)
                pl.BlockSpec((1, cin, nx), lambda b, mt: (b, 0, (mt + 1) * (tm // nx))),
                # weight: constant block index -> DMA'd once, resident across the grid.
                # TODO(synk): pl.Buffered(1) would drop the unused second weight buffer;
                # left at the default since the weight is tiny at these shapes.
                w_spec,
            ],
            out_specs=pl.BlockSpec((1, cout, tm), lambda b, mt: (b, 0, mt)),
            scratch_shapes=scratch),
        compiler_params=pltpu.CompilerParams(
            dimension_semantics=("parallel", "parallel"),
            vmem_limit_bytes=vmem_limit),
    )(xf, xf, wk)

    # Flat -> (N, Cout, Ho1, Wp); drop the (k-1) wrapped garbage columns per row.
    # TODO(synk): this crop is one output-sized HBM copy; in a fused graph, fold it into
    # the consumer (or keep the padded-W layout downstream) to remove it.
    y = out[:, :, :m].reshape(n, cout, ho1, wp)[:, :, :, :wo1]
    if stride > 1:
        # TODO(synk): stride>1 subsamples the stride-1 result (stride^2 extra work); a
        # strided-lane-read kernel variant would compute the strided output directly.
        y = y[:, :, ::stride, ::stride]
    return y


def _reference(x, weight, stride):
    pad = weight.shape[-1] // 2
    y = jax.lax.conv_general_dilated(
        x, weight, window_strides=(stride, stride),
        padding=[(pad, pad), (pad, pad)],
        dimension_numbers=("NCHW", "OIHW", "NCHW"))
    return jnp.maximum(y, 0.0)


if __name__ == "__main__":
    key = jax.random.PRNGKey(0)
    k_x, k_w = jax.random.split(key)

    # BasicConv_do_eval(in_channel=4, out_channel=8, kernel_size=3, stride=1)
    N, Cin, H, W = 2, 4, 16, 16
    Cout, ksize, stride = 8, 3, 1

    x = jax.random.normal(k_x, (N, Cin, H, W), dtype=jnp.float32)
    fan_in = Cin * ksize * ksize
    bound = 1.0 / (fan_in ** 0.5)
    weight = jax.random.uniform(k_w, (Cout, Cin, ksize, ksize),
                                dtype=jnp.float32, minval=-bound, maxval=bound)

    y = jax.block_until_ready(basic_conv_do_eval(x, weight, stride=stride))
    assert y.shape == (N, Cout, H, W), y.shape

    # Kernel uses bf16 inputs + f32 accumulation: tight check vs a reference fed the same
    # bf16-rounded inputs, loose check vs the pure-f32 module math.
    xb = x.astype(jnp.bfloat16).astype(jnp.float32)
    wb = weight.astype(jnp.bfloat16).astype(jnp.float32)
    assert jnp.allclose(y, _reference(xb, wb, stride), atol=1e-4, rtol=1e-4), \
        "mismatch vs bf16-rounded reference"
    assert jnp.allclose(y, _reference(x, weight, stride), atol=5e-2, rtol=5e-2), \
        "mismatch vs f32 reference"

    # stride=2 path (same kernel; wrapper-side subsampling)
    y2 = jax.block_until_ready(basic_conv_do_eval(x, weight, stride=2))
    assert y2.shape == (N, Cout, H // 2, W // 2), y2.shape
    assert jnp.allclose(y2, _reference(xb, wb, 2), atol=1e-4, rtol=1e-4), \
        "mismatch vs reference (stride=2)"

    # bf16 output store (v5e writeback optimization) — looser tolerance for the final cast.
    y3 = jax.block_until_ready(
        basic_conv_do_eval(x, weight, stride=1, out_dtype=jnp.bfloat16))
    assert y3.shape == (N, Cout, H, W) and y3.dtype == jnp.bfloat16
    assert jnp.allclose(y3.astype(jnp.float32), _reference(xb, wb, 1),
                        atol=3e-2, rtol=3e-2), "mismatch vs reference (bf16 output)"

    print("KERNEL_OK")
</pallas_src>

<mosaic_0001>
module attributes {stable_mosaic.version = 11 : i64} {
  func.func @_fused_kernel(%arg0: i32, %arg1: i32, %arg2: memref<1x4x384xbf16, #tpu.memory_space<vmem>>, %arg3: memref<1x4x128xbf16, #tpu.memory_space<vmem>>, %arg4: memref<8x36xbf16, #tpu.memory_space<vmem>>, %arg5: memref<1x8x384xf32, #tpu.memory_space<vmem>>, %arg6: memref<4x512xbf16, #tpu.memory_space<vmem>>, %arg7: memref<36x384xf32, #tpu.memory_space<vmem>>) attributes {dimension_semantics = [#tpu.dimension_semantics<parallel>, #tpu.dimension_semantics<parallel>], iteration_bounds = array<i64: 2, 1>, scalar_prefetch = 0 : i64, scratch_operands = 2 : i64, tpu.core_type = #tpu.core_type<tc>, window_params = [{transform_indices = @transform_0, window_bounds = array<i64: 1, 4, 384>}, {transform_indices = @transform_1, window_bounds = array<i64: 1, 4, 128>}, {pipeline_mode = #tpu.pipeline_mode<synchronous>, transform_indices = @transform_2, window_bounds = array<i64: 8, 36>}, {transform_indices = @transform_3, window_bounds = array<i64: 1, 8, 384>}]} {
    %c0 = arith.constant 0 : index
    %c0_0 = arith.constant 0 : index
    %c0_1 = arith.constant 0 : index
    %0 = vector.load %arg2[%c0, %c0_0, %c0_1] : memref<1x4x384xbf16, #tpu.memory_space<vmem>>, vector<1x4x384xbf16>
    %1 = vector.shape_cast %0 : vector<1x4x384xbf16> to vector<4x384xbf16>
    %c0_2 = arith.constant 0 : index
    %c0_3 = arith.constant 0 : index
    %2 = vector.load %arg6[%c0_2, %c0_3] : memref<4x512xbf16, #tpu.memory_space<vmem>>, vector<4x384xbf16>
    tpu.vector_store %arg6[%c0_2, %c0_3], %1 {strides = array<i32>} : memref<4x512xbf16, #tpu.memory_space<vmem>>, vector<4x384xbf16>,
    %c0_4 = arith.constant 0 : index
    %c0_5 = arith.constant 0 : index
    %c0_6 = arith.constant 0 : index
    %3 = vector.load %arg3[%c0_4, %c0_5, %c0_6] : memref<1x4x128xbf16, #tpu.memory_space<vmem>>, vector<1x4x128xbf16>
    %4 = vector.shape_cast %3 : vector<1x4x128xbf16> to vector<4x128xbf16>
    %c0_7 = arith.constant 0 : index
    %c384 = arith.constant 384 : index
    %5 = vector.load %arg6[%c0_7, %c384] : memref<4x512xbf16, #tpu.memory_space<vmem>>, vector<4x128xbf16>
    tpu.vector_store %arg6[%c0_7, %c384], %4 {strides = array<i32>} : memref<4x512xbf16, #tpu.memory_space<vmem>>, vector<4x128xbf16>,
    %c0_8 = arith.constant 0 : index
    %c0_9 = arith.constant 0 : index
    %6 = vector.load %arg6[%c0_8, %c0_9] : memref<4x512xbf16, #tpu.memory_space<vmem>>, vector<4x384xbf16>
    %7 = arith.extf %6 : vector<4x384xbf16> to vector<4x384xf32>
    %c0_10 = arith.constant 0 : index
    %c0_11 = arith.constant 0 : index
    %8 = vector.load %arg7[%c0_10, %c0_11] : memref<36x384xf32, #tpu.memory_space<vmem>>, vector<4x384xf32>
    tpu.vector_store %arg7[%c0_10, %c0_11], %7 {strides = array<i32>} : memref<36x384xf32, #tpu.memory_space<vmem>>, vector<4x384xf32>,
    %c0_12 = arith.constant 0 : index
    %c1 = arith.constant 1 : index
    %9 = vector.load %arg6[%c0_12, %c1] : memref<4x512xbf16, #tpu.memory_space<vmem>>, vector<4x384xbf16>
    %10 = arith.extf %9 : vector<4x384xbf16> to vector<4x384xf32>
    %c4 = arith.constant 4 : index
    %c0_13 = arith.constant 0 : index
    %11 = vector.load %arg7[%c4, %c0_13] : memref<36x384xf32, #tpu.memory_space<vmem>>, vector<4x384xf32>
    tpu.vector_store %arg7[%c4, %c0_13], %10 {strides = array<i32>} : memref<36x384xf32, #tpu.memory_space<vmem>>, vector<4x384xf32>,
    %c0_14 = arith.constant 0 : index
    %c2 = arith.constant 2 : index
    %12 = vector.load %arg6[%c0_14, %c2] : memref<4x512xbf16, #tpu.memory_space<vmem>>, vector<4x384xbf16>
    %13 = arith.extf %12 : vector<4x384xbf16> to vector<4x384xf32>
    %c8 = arith.constant 8 : index
    %c0_15 = arith.constant 0 : index
    %14 = vector.load %arg7[%c8, %c0_15] : memref<36x384xf32, #tpu.memory_space<vmem>>, vector<4x384xf32>
    tpu.vector_store %arg7[%c8, %c0_15], %13 {strides = array<i32>} : memref<36x384xf32, #tpu.memory_space<vmem>>, vector<4x384xf32>,
    %c0_16 = arith.constant 0 : index
    %c18 = arith.constant 18 : index
    %15 = vector.load %arg6[%c0_16, %c18] : memref<4x512xbf16, #tpu.memory_space<vmem>>, vector<4x384xbf16>
    %16 = arith.extf %15 : vector<4x384xbf16> to vector<4x384xf32>
    %c12 = arith.constant 12 : index
    %c0_17 = arith.constant 0 : index
    %17 = vector.load %arg7[%c12, %c0_17] : memref<36x384xf32, #tpu.memory_space<vmem>>, vector<4x384xf32>
    tpu.vector_store %arg7[%c12, %c0_17], %16 {strides = array<i32>} : memref<36x384xf32, #tpu.memory_space<vmem>>, vector<4x384xf32>,
    %c0_18 = arith.constant 0 : index
    %c19 = arith.constant 19 : index
    %18 = vector.load %arg6[%c0_18, %c19] : memref<4x512xbf16, #tpu.memory_space<vmem>>, vector<4x384xbf16>
    %19 = arith.extf %18 : vector<4x384xbf16> to vector<4x384xf32>
    %c16 = arith.constant 16 : index
    %c0_19 = arith.constant 0 : index
    %20 = vector.load %arg7[%c16, %c0_19] : memref<36x384xf32, #tpu.memory_space<vmem>>, vector<4x384xf32>
    tpu.vector_store %arg7[%c16, %c0_19], %19 {strides = array<i32>} : memref<36x384xf32, #tpu.memory_space<vmem>>, vector<4x384xf32>,
    %c0_20 = arith.constant 0 : index
    %c20 = arith.constant 20 : index
    %21 = vector.load %arg6[%c0_20, %c20] : memref<4x512xbf16, #tpu.memory_space<vmem>>, vector<4x384xbf16>
    %22 = arith.extf %21 : vector<4x384xbf16> to vector<4x384xf32>
    %c20_21 = arith.constant 20 : index
    %c0_22 = arith.constant 0 : index
    %23 = vector.load %arg7[%c20_21, %c0_22] : memref<36x384xf32, #tpu.memory_space<vmem>>, vector<4x384xf32>
    tpu.vector_store %arg7[%c20_21, %c0_22], %22 {strides = array<i32>} : memref<36x384xf32, #tpu.memory_space<vmem>>, vector<4x384xf32>,
    %c0_23 = arith.constant 0 : index
    %c36 = arith.constant 36 : index
    %24 = vector.load %arg6[%c0_23, %c36] : memref<4x512xbf16, #tpu.memory_space<vmem>>, vector<4x384xbf16>
    %25 = arith.extf %24 : vector<4x384xbf16> to vector<4x384xf32>
    %c24 = arith.constant 24 : index
    %c0_24 = arith.constant 0 : index
    %26 = vector.load %arg7[%c24, %c0_24] : memref<36x384xf32, #tpu.memory_space<vmem>>, vector<4x384xf32>
    tpu.vector_store %arg7[%c24, %c0_24], %25 {strides = array<i32>} : memref<36x384xf32, #tpu.memory_space<vmem>>, vector<4x384xf32>,
    %c0_25 = arith.constant 0 : index
    %c37 = arith.constant 37 : index
    %27 = vector.load %arg6[%c0_25, %c37] : memref<4x512xbf16, #tpu.memory_space<vmem>>, vector<4x384xbf16>
    %28 = arith.extf %27 : vector<4x384xbf16> to vector<4x384xf32>
    %c28 = arith.constant 28 : index
    %c0_26 = arith.constant 0 : index
    %29 = vector.load %arg7[%c28, %c0_26] : memref<36x384xf32, #tpu.memory_space<vmem>>, vector<4x384xf32>
    tpu.vector_store %arg7[%c28, %c0_26], %28 {strides = array<i32>} : memref<36x384xf32, #tpu.memory_space<vmem>>, vector<4x384xf32>,
    %c0_27 = arith.constant 0 : index
    %c38 = arith.constant 38 : index
    %30 = vector.load %arg6[%c0_27, %c38] : memref<4x512xbf16, #tpu.memory_space<vmem>>, vector<4x384xbf16>
    %31 = arith.extf %30 : vector<4x384xbf16> to vector<4x384xf32>
    %c32 = arith.constant 32 : index
    %c0_28 = arith.constant 0 : index
    %32 = vector.load %arg7[%c32, %c0_28] : memref<36x384xf32, #tpu.memory_space<vmem>>, vector<4x384xf32>
    tpu.vector_store %arg7[%c32, %c0_28], %31 {strides = array<i32>} : memref<36x384xf32, #tpu.memory_space<vmem>>, vector<4x384xf32>,
    %c0_29 = arith.constant 0 : index
    %c0_30 = arith.constant 0 : index
    %33 = vector.load %arg4[%c0_29, %c0_30] : memref<8x36xbf16, #tpu.memory_space<vmem>>, vector<8x36xbf16>
    %c0_31 = arith.constant 0 : index
    %c0_32 = arith.constant 0 : index
    %34 = vector.load %arg7[%c0_31, %c0_32] : memref<36x384xf32, #tpu.memory_space<vmem>>, vector<36x384xf32>
    %35 = arith.truncf %34 : vector<36x384xf32> to vector<36x384xbf16>
    %cst = arith.constant dense<0.000000e+00> : vector<8x384xf32>
    %36 = tpu.matmul %33, %35, %cst {dimension_numbers = #tpu.dot_dimension_numbers<[1], [0], [0], [1], [0, 0, 1, 1], [], []>} : vector<8x36xbf16>, vector<36x384xbf16>, vector<8x384xf32> -> vector<8x384xf32>
    %cst_33 = arith.constant 0.000000e+00 : f32
    %37 = vector.broadcast %cst_33 : f32 to vector<8x384xf32>
    %38 = arith.maximumf %36, %37 : vector<8x384xf32>
    %c0_34 = arith.constant 0 : index
    %c0_35 = arith.constant 0 : index
    %c0_36 = arith.constant 0 : index
    %39 = vector.load %arg5[%c0_34, %c0_35, %c0_36] : memref<1x8x384xf32, #tpu.memory_space<vmem>>, vector<1x8x384xf32>
    %40 = vector.shape_cast %39 : vector<1x8x384xf32> to vector<8x384xf32>
    %41 = vector.shape_cast %38 : vector<8x384xf32> to vector<1x8x384xf32>
    tpu.vector_store %arg5[%c0_34, %c0_35, %c0_36], %41 {strides = array<i32>} : memref<1x8x384xf32, #tpu.memory_space<vmem>>, vector<1x8x384xf32>,
    return
  }
  func.func @transform_0(%arg0: i32, %arg1: i32) -> (i32, i32, i32) {
    %c0_i32 = arith.constant 0 : i32
    %c0_i32_0 = arith.constant 0 : i32
    return %arg0, %c0_i32, %arg1 : i32, i32, i32
  }
  func.func @transform_1(%arg0: i32, %arg1: i32) -> (i32, i32, i32) {
    %c1_i32 = arith.constant 1 : i32
    %0 = arith.addi %arg1, %c1_i32 : i32
    %c3_i32 = arith.constant 3 : i32
    %1 = arith.muli %0, %c3_i32 : i32
    %c0_i32 = arith.constant 0 : i32
    %c0_i32_0 = arith.constant 0 : i32
    return %arg0, %c0_i32, %1 : i32, i32, i32
  }
  func.func @transform_2(%arg0: i32, %arg1: i32) -> (i32, i32) {
    %c0_i32 = arith.constant 0 : i32
    %c0_i32_0 = arith.constant 0 : i32
    %c0_i32_1 = arith.constant 0 : i32
    return %c0_i32, %c0_i32_0 : i32, i32
  }
  func.func @transform_3(%arg0: i32, %arg1: i32) -> (i32, i32, i32) {
    %c0_i32 = arith.constant 0 : i32
    %c0_i32_0 = arith.constant 0 : i32
    return %arg0, %c0_i32, %arg1 : i32, i32, i32
  }
}

</mosaic_0001>

<llo_original>
// kernel: basic_conv_do_eval.1
$region0: #{basic_conv_do_eval.1}
  #allocation0 [shape = 'u32[]', space=smem, size = 0x4, offset = 0x4, fixed_abs, tag = 'smem constant byte address 0x4 - core index']
  #allocation1 [shape = 'u32[72,128]{1,0:T(1,128)}', space=vmem, size = 0x9000, scoped, tag = 'internal scratch']
  #allocation2 [shape = 'bf16[4,512]{1,0:T(4,128)(2,1)}', space=vmem, size = 0x1000, scoped, tag = 'scratch operand']
  #allocation3 [shape = 'f32[36,384]{1,0:T(8,128)}', space=vmem, size = 0xf000, scoped, tag = 'scratch operand']
  %s0 = inlined_call_operand.vmem [shape: bf16[2,4,512], index: 0, kind: input, shape index: {}, may-alias: {0,1}]
  %s1 = inlined_call_operand.vmem [shape: bf16[2,4,512], index: 1, kind: input, shape index: {}, may-alias: {0,1}]
  %s2 = inlined_call_operand.vmem [shape: bf16[8,36], index: 2, kind: input, shape index: {}]
  %s3 = inlined_call_operand.vmem [shape: f32[2,8,384], index: 3, kind: output, shape index: {}]
  %s4 = sld [smem:[#allocation0]]
  $region45: #{basic_conv_do_eval.1} parent=0
    _
  %s6 = ssub.s32 1, %s4
  %s7 = scalar_select 0, %s6, %s4
  loop: start=0, step=1, limit=4
  $region2: #{basic_conv_do_eval.1} parent=0 // loop_pre_header
    _
  $region3: #{basic_conv_do_eval.1} parent=0 // loop_header
    %s9 = sphi 0, %s13
    %p10 = scmp.ge.s32.totalorder %s9, 4
    %s16 = sphi 0, %s28
    %s17 = sphi 0, %s24
    %s18 = sphi 0, %s16
    %s19 = sphi 0, %s17
    %s20 = sphi 0, %s18
    %s21 = sphi 0, %s19
    %s33 = sphi 0, %s35
    %s36 = sphi 0, %s33
    %s37 = sphi 0, %s36
    %s53 = sphi 0, %s37
    %s65 = sphi 0, %s67
    %s68 = sphi 0, %s65
    %s69 = sphi 0, %s68
    %s85 = sphi 0, %s69
    %s89 = sphi 0, %s89
    %s91 = sphi 0, %s89
    %s92 = sphi 0, %s91
    %s106 = sphi 0, %s92
    %s114 = sphi 0, %s116
    %s117 = sphi 0, %s114
    %s118 = sphi 0, %s117
    %s134 = sphi 0, %s118
  $region4: #{basic_conv_do_eval.1} parent=0 // loop_header_branch
    %12 = sbr.rel (%p10) target = $region8
  $region5: #{basic_conv_do_eval.1} parent=0 // loop_body
    %s14 = ssub.s32 %s9, 1
    %s15 = ssub.s32 %s9, 2
    %s22 = sadd.s32 1, %s17
    %p23 = scmp.ge.s32.totalorder %s22, 1
    %s24 = scalar_select %p23, 0, %s22
    %s25 = sadd.s32 1, %s16
    %s26 = scalar_select %p23, %s25, %s16
    %p27 = scmp.ge.s32.totalorder %s26, 2
    %s28 = scalar_select %p27, 0, %s26
    %s29 = ssub.s32 %s16, %s28
    %s30 = ssub.s32 %s17, %s24
    %s31 = sor.u32 %s29, %s30
    %p32 = scmp.eq.s32.totalorder %s31, 0
    %s34 = sadd.s32 %s33, 1
    %s35 = scalar_select %p32, %s33, %s34
    %p38 = pneg %p32
    %p39 = scmp.eq.s32.totalorder %s9, 1
    %p40 = por %p38, %p39
    %p41 = scmp.ne.s32.totalorder %s33, %s36
    %p42 = scmp.eq.s32.totalorder %s9, 0
    %p43 = por %p41, %p42
    %p44 = scmp.ne.s32.totalorder %s33, %s36
    %p45 = scmp.eq.s32.totalorder %s14, 1
    %p46 = por %p44, %p45
    %p47 = scmp.ne.s32.totalorder %s36, %s37
    %p48 = scmp.eq.s32.totalorder %s14, 0
    %p49 = por %p47, %p48
    %p50 = scmp.ne.s32.totalorder %s36, %s37
    %p51 = scmp.eq.s32.totalorder %s15, 1
    %p52 = por %p50, %p51
    %p54 = scmp.ne.s32.totalorder %s37, %s53
    %p55 = scmp.eq.s32.totalorder %s15, 0
    %p56 = por %p54, %p55
    %s57 = sadd.s32 %s17, 1
    %s58 = smul.u32 %s57, 3
    %s59 = sadd.s32 %s24, 1
    %s60 = smul.u32 %s59, 3
    %s61 = ssub.s32 %s16, %s28
    %s62 = ssub.s32 %s58, %s60
    %s63 = sor.u32 %s61, %s62
    %p64 = scmp.eq.s32.totalorder %s63, 0
    %s66 = sadd.s32 %s65, 1
    %s67 = scalar_select %p64, %s65, %s66
    %p70 = pneg %p64
    %p71 = scmp.eq.s32.totalorder %s9, 1
    %p72 = por %p70, %p71
    %p73 = scmp.ne.s32.totalorder %s65, %s68
    %p74 = scmp.eq.s32.totalorder %s9, 0
    %p75 = por %p73, %p74
    %p76 = scmp.ne.s32.totalorder %s65, %s68
    %p77 = scmp.eq.s32.totalorder %s14, 1
    %p78 = por %p76, %p77
    %p79 = scmp.ne.s32.totalorder %s68, %s69
    %p80 = scmp.eq.s32.totalorder %s14, 0
    %p81 = por %p79, %p80
    %p82 = scmp.ne.s32.totalorder %s68, %s69
    %p83 = scmp.eq.s32.totalorder %s15, 1
    %p84 = por %p82, %p83
    %p86 = scmp.ne.s32.totalorder %s69, %s85
    %p87 = scmp.eq.s32.totalorder %s15, 0
    %p88 = por %p86, %p87
    %s90 = sadd.s32 %s89, 1
    %p93 = scmp.eq.s32.totalorder %s9, 1
    %p94 = scmp.ne.s32.totalorder %s89, %s91
    %p95 = scmp.eq.s32.totalorder %s9, 0
    %p96 = por %p94, %p95
    %p97 = scmp.ne.s32.totalorder %s89, %s91
    %p98 = scmp.eq.s32.totalorder %s14, 1
    %p99 = por %p97, %p98
    %p100 = scmp.ne.s32.totalorder %s91, %s92
    %p101 = scmp.eq.s32.totalorder %s14, 0
    %p102 = por %p100, %p101
    %p103 = scmp.ne.s32.totalorder %s91, %s92
    %p104 = scmp.eq.s32.totalorder %s15, 1
    %p105 = por %p103, %p104
    %p107 = scmp.ne.s32.totalorder %s92, %s106
    %p108 = scmp.eq.s32.totalorder %s15, 0
    %p109 = por %p107, %p108
    %s110 = ssub.s32 %s16, %s28
    %s111 = ssub.s32 %s17, %s24
    %s112 = sor.u32 %s110, %s111
    %p113 = scmp.eq.s32.totalorder %s112, 0
    %s115 = sadd.s32 %s114, 1
    %s116 = scalar_select %p113, %s114, %s115
    %p119 = pneg %p113
    %p120 = scmp.eq.s32.totalorder %s9, 1
    %p121 = por %p119, %p120
    %p122 = scmp.ne.s32.totalorder %s114, %s117
    %p123 = scmp.eq.s32.totalorder %s9, 0
    %p124 = por %p122, %p123
    %p125 = scmp.ne.s32.totalorder %s114, %s117
    %p126 = scmp.eq.s32.totalorder %s14, 1
    %p127 = por %p125, %p126
    %p128 = scmp.ne.s32.totalorder %s117, %s118
    %p129 = scmp.eq.s32.totalorder %s14, 0
    %p130 = por %p128, %p129
    %p131 = scmp.ne.s32.totalorder %s117, %s118
    %p132 = scmp.eq.s32.totalorder %s15, 1
    %p133 = por %p131, %p132
    %p135 = scmp.ne.s32.totalorder %s118, %s134
    %p136 = scmp.eq.s32.totalorder %s15, 0
    %p137 = por %p135, %p136
    %p138 = scmp.le.s32.totalorder 1, %s9
    %p139 = scmp.lt.s32.totalorder %s9, 3
    %p140 = pnand %p138, %p139
    %p141 = pneg %p140
    // Predicated region
    $region9: #{basic_conv_do_eval.1} parent=5 // pred_check
      _
    $region10: #{basic_conv_do_eval.1} parent=5 // pred_check_branch
      %143 = sbr.rel (%p140) target = $region12
    $region11: #{basic_conv_do_eval.1} parent=5 // pred_region
      %s144 = ssub.s32 %s9, 1
      // Predicated region
      $region13: #{basic_conv_do_eval.1} parent=11 // pred_check
        %p145 = pneg %p102
      $region14: #{basic_conv_do_eval.1} parent=11 // pred_check_branch
        %147 = sbr.rel (%p145) target = $region16
      $region15: #{basic_conv_do_eval.1} parent=11 // pred_region
        _
      $region16: #{basic_conv_do_eval.1} parent=11 // pred_fallthru
        _
    $region12: #{basic_conv_do_eval.1} parent=5 // pred_fallthru
      _
    %p148 = scmp.lt.s32.totalorder %s9, 2
    // Predicated region
    $region17: #{basic_conv_do_eval.1} parent=5 // pred_check
      %p149 = pneg %p148
    $region18: #{basic_conv_do_eval.1} parent=5 // pred_check_branch
      %151 = sbr.rel (%p149) target = $region20
    $region19: #{basic_conv_do_eval.1} parent=5 // pred_region
      // Predicated region
      $region21: #{basic_conv_do_eval.1} parent=19 // pred_check
        %p152 = pneg %p43
      $region22: #{basic_conv_do_eval.1} parent=19 // pred_check_branch
        %154 = sbr.rel (%p152) target = $region24
      $region23: #{basic_conv_do_eval.1} parent=19 // pred_region
        %s155 = smul.u32 3, %s17
        %s156 = ssub.s32 4, %s155
        %p157 = scmp.lt.s32.totalorder %s156, 3
        %s158 = scalar_select %p157, %s156, 3
        %s159 = smul.u32 2, %s158
        %p160 = scmp.lt.s32.totalorder %s16, 1
        %s161 = scalar_select %p160, %s16, 1
        %p162 = scmp.lt.s32.totalorder %s155, 3
        %s163 = scalar_select %p162, %s155, 3
        %s164 = smul.addr %s161, 4
        %s165 = sadd.s32 %s163, %s164
        %s166 = smul.addr %s165, 2
        %s167 = scalar_lea.vmem %s0, %s166
        %s168 = smul.u32 3, %s17
        %s169 = ssub.s32 4, %s168
        %p170 = scmp.lt.s32.totalorder %s169, 3
        %s171 = scalar_select %p170, %s169, 3
        %s172 = smul.u32 2, %s171
      $region24: #{basic_conv_do_eval.1} parent=19 // pred_fallthru
        _
      // Predicated region
      $region25: #{basic_conv_do_eval.1} parent=19 // pred_check
        %p173 = pneg %p75
      $region26: #{basic_conv_do_eval.1} parent=19 // pred_check_branch
        %175 = sbr.rel (%p173) target = $region28
      $region27: #{basic_conv_do_eval.1} parent=19 // pred_region
        %s176 = sadd.s32 %s17, 1
        %s177 = smul.u32 %s176, 3
        %p178 = scmp.lt.s32.totalorder %s16, 1
        %s179 = scalar_select %p178, %s16, 1
        %p180 = scmp.lt.s32.totalorder %s177, 3
        %s181 = scalar_select %p180, %s177, 3
        %s182 = smul.addr %s179, 4
        %s183 = sadd.s32 %s181, %s182
        %s184 = smul.addr %s183, 2
        %s185 = scalar_lea.vmem %s1, %s184
        %s186 = sadd.s32 %s17, 1
        %s187 = smul.u32 %s186, 3
      $region28: #{basic_conv_do_eval.1} parent=19 // pred_fallthru
        _
    $region20: #{basic_conv_do_eval.1} parent=5 // pred_fallthru
      _
    %p188 = scmp.le.s32.totalorder 1, %s9
    %p189 = scmp.lt.s32.totalorder %s9, 3
    %p190 = pnand %p188, %p189
    %p191 = pneg %p190
    // Predicated region
    $region29: #{basic_conv_do_eval.1} parent=5 // pred_check
      _
    $region30: #{basic_conv_do_eval.1} parent=5 // pred_check_branch
      %193 = sbr.rel (%p190) target = $region32
    $region31: #{basic_conv_do_eval.1} parent=5 // pred_region
      %s194 = ssub.s32 %s9, 1
      %s195 = smul.u32 3, %s19
      %s196 = ssub.s32 4, %s195
      %p197 = scmp.lt.s32.totalorder %s196, 3
      %s198 = scalar_select %p197, %s196, 3
      %s199 = smul.u32 2, %s198
      %p200 = scmp.lt.s32.totalorder %s18, 1
      %s201 = scalar_select %p200, %s18, 1
      %p202 = scmp.lt.s32.totalorder %s195, 3
      %s203 = scalar_select %p202, %s195, 3
      %s204 = smul.addr %s201, 4
      %s205 = sadd.s32 %s203, %s204
      %s206 = smul.addr %s205, 2
      %s207 = scalar_lea.vmem %s0, %s206
      %p208 = pneg %p49
      %p209 = pneg %p46
      %s210 = sadd.s32 %s19, 1
      %s211 = smul.u32 %s210, 3
      %p212 = scmp.lt.s32.totalorder %s18, 1
      %s213 = scalar_select %p212, %s18, 1
      %p214 = scmp.lt.s32.totalorder %s211, 3
      %s215 = scalar_select %p214, %s211, 3
      %s216 = smul.addr %s213, 4
      %s217 = sadd.s32 %s215, %s216
      %s218 = smul.addr %s217, 2
      %s219 = scalar_lea.vmem %s1, %s218
      %p220 = pneg %p81
      %p221 = pneg %p78
      %p222 = pneg %p102
      %p223 = pneg %p99
      %p224 = pneg %p130
      %p225 = pneg %p127
      %s226 = smul.u32 3, %s19
      %p227 = scmp.lt.s32.totalorder %s18, 1
      %s228 = scalar_select %p227, %s18, 1
      %p229 = scmp.lt.s32.totalorder %s226, 2
      %s230 = scalar_select %p229, %s226, 2
      %s231 = smul.addr %s228, 3
      %s232 = sadd.s32 %s230, %s231
      %s233 = smul.addr %s232, 8
      %s234 = scalar_lea.vmem %s3, %s233
      %s235 = smul.u32 3, %s19
      %s236 = ssub.s32 4, %s235
      %p237 = scmp.lt.s32.totalorder %s236, 3
      %s238 = scalar_select %p237, %s236, 3
      %s239 = smul.u32 2, %s238
      %p240 = scmp.lt.s32.totalorder %s18, 1
      %s241 = scalar_select %p240, %s18, 1
      %p242 = scmp.lt.s32.totalorder %s235, 3
      %s243 = scalar_select %p242, %s235, 3
      %s244 = smul.addr %s241, 4
      %s245 = sadd.s32 %s243, %s244
      %s246 = smul.addr %s245, 2
      %s247 = scalar_lea.vmem %s0, %s246
      %s248 = smul.u32 3, %s19
      %s249 = ssub.s32 4, %s248
      %p250 = scmp.lt.s32.totalorder %s249, 3
      %s251 = scalar_select %p250, %s249, 3
      %s252 = smul.u32 2, %s251
      %s253 = sadd.s32 %s19, 1
      %s254 = smul.u32 %s253, 3
      %p255 = scmp.lt.s32.totalorder %s18, 1
      %s256 = scalar_select %p255, %s18, 1
      %p257 = scmp.lt.s32.totalorder %s254, 3
      %s258 = scalar_select %p257, %s254, 3
      %s259 = smul.addr %s256, 4
      %s260 = sadd.s32 %s258, %s259
      %s261 = smul.addr %s260, 2
      %s262 = scalar_lea.vmem %s1, %s261
      %s263 = sadd.s32 %s19, 1
      %s264 = smul.u32 %s263, 3
      %s265 = smul.u32 3, %s19
      %p266 = scmp.lt.s32.totalorder %s18, 1
      %s267 = scalar_select %p266, %s18, 1
      %p268 = scmp.lt.s32.totalorder %s265, 2
      %s269 = scalar_select %p268, %s265, 2
      %s270 = smul.addr %s267, 3
      %s271 = sadd.s32 %s269, %s270
      %s272 = smul.addr %s271, 8
      %s273 = scalar_lea.vmem %s3, %s272
      %s274 = smul.u32 3, %s19
      %v276 = vld [vmem:[%s247] sm:$0x3f]
      %277 = vst [vmem:[#allocation2] sm:$0x3f] %v276
      %v278 = vld [vmem:[%s262] sm:$0x3]
      %279 = vst [vmem:[#allocation2 + $0x6] sm:$0x3] %v278
      %v280 = vld [vmem:[#allocation2] sm:$0x3f]
      %v281 = vunpack.c.l.bf16 %v280
      %v282 = vunpack.c.h.bf16 %v280
      %285 = vst [vmem:[#allocation1] ss:$2 sm:$0xff] %v281
      %s286 = scalar_lea.vmem [#allocation1], 16
      %287 = vst [vmem:[%s286] ss:$2 sm:$0xff] %v282
      %v288 = vld.sshfl [vmem:[#allocation1] sm:$0xff pattern:$0x75316420]
      %v289 = vld.sshfl [vmem:[#allocation1 + $0x8] sm:$0xff pattern:$0x75316420]
      %v290 = vld.sshfl [vmem:[#allocation1 + $0x10] sm:$0xff pattern:$0x75316420]
      %294 = vst [vmem:[#allocation3] sm:$0xf] %v288
      %295 = vst [vmem:[#allocation3 + $0x8] sm:$0xf] %v289
      %296 = vst [vmem:[#allocation3 + $0x10] sm:$0xf] %v290
      %v297 = vld [vmem:[#allocation2] sm:$0xff]
      %v298 = vunpack.c.l.bf16 %v297
      %v299 = vunpack.c.h.bf16 %v297
      %s302 = scalar_lea.vmem [#allocation1], 1
      %303 = vst [vmem:[%s302] ss:$2 sm:$0xff] %v298
      %s304 = scalar_lea.vmem [#allocation1], 17
      %305 = vst [vmem:[%s304] ss:$2 sm:$0xff] %v299
      %v306 = vld.sshfl [vmem:[#allocation1] sm:$0xff pattern:$0x75316420]
      %v307 = vld.sshfl [vmem:[#allocation1 + $0x8] sm:$0xff pattern:$0x75316420]
      %v308 = vld.sshfl [vmem:[#allocation1 + $0x10] sm:$0xff pattern:$0x75316420]
      %v309 = vld.sshfl [vmem:[#allocation1 + $0x18] sm:$0xff pattern:$0x75316420]
      %310 = vrot.lane.b32.xlu0 %v306, 127
      %v311 = vpop.permute.xlu0 %310
      %312 = vrot.lane.b32.xlu0 %v307, 127
      %v313 = vpop.permute.xlu0 %312
      %314 = vrot.lane.b32.xlu0 %v308, 127
      %v315 = vpop.permute.xlu0 %314
      %316 = vrot.lane.b32.xlu0 %v309, 127
      %v317 = vpop.permute.xlu0 %316
      %vm318 = vcmask 1039360
      %v319 = vsel %vm318, %v311, %v313
      %v320 = vsel %vm318, %v313, %v315
      %v321 = vsel %vm318, %v315, %v317
      %325 = vst [vmem:[#allocation3] sm:$0xf0] %v319
      %326 = vst [vmem:[#allocation3 + $0x8] sm:$0xf0] %v320
      %327 = vst [vmem:[#allocation3 + $0x10] sm:$0xf0] %v321
      %v328 = vld [vmem:[#allocation2] sm:$0xff]
      %v329 = vunpack.c.l.bf16 %v328
      %v330 = vunpack.c.h.bf16 %v328
      %333 = vst [vmem:[#allocation1] ss:$2 sm:$0xff] %v329
      %s334 = scalar_lea.vmem [#allocation1], 16
      %335 = vst [vmem:[%s334] ss:$2 sm:$0xff] %v330
      %v336 = vld.sshfl [vmem:[#allocation1] sm:$0xff pattern:$0x75316420]
      %v337 = vld.sshfl [vmem:[#allocation1 + $0x8] sm:$0xff pattern:$0x75316420]
      %v338 = vld.sshfl [vmem:[#allocation1 + $0x10] sm:$0xff pattern:$0x75316420]
      %v339 = vld.sshfl [vmem:[#allocation1 + $0x18] sm:$0xff pattern:$0x75316420]
      %340 = vrot.lane.b32.xlu0 %v336, 126
      %v341 = vpop.permute.xlu0 %340
      %342 = vrot.lane.b32.xlu0 %v337, 126
      %v343 = vpop.permute.xlu0 %342
      %344 = vrot.lane.b32.xlu0 %v338, 126
      %v345 = vpop.permute.xlu0 %344
      %346 = vrot.lane.b32.xlu0 %v339, 126
      %v347 = vpop.permute.xlu0 %346
      %vm348 = vcmask 1031168
      %v349 = vsel %vm348, %v341, %v343
      %v350 = vsel %vm348, %v343, %v345
      %v351 = vsel %vm348, %v345, %v347
      %355 = vst [vmem:[#allocation3 + $0x18] sm:$0xf] %v349
      %356 = vst [vmem:[#allocation3 + $0x20] sm:$0xf] %v350
      %357 = vst [vmem:[#allocation3 + $0x28] sm:$0xf] %v351
      %v358 = vld [vmem:[#allocation2] sm:$0xff]
      %v359 = vunpack.c.l.bf16 %v358
      %v360 = vunpack.c.h.bf16 %v358
      %s363 = scalar_lea.vmem [#allocation1], 1
      %364 = vst [vmem:[%s363] ss:$2 sm:$0xff] %v359
      %s365 = scalar_lea.vmem [#allocation1], 17
      %366 = vst [vmem:[%s365] ss:$2 sm:$0xff] %v360
      %v367 = vld.sshfl [vmem:[#allocation1] sm:$0xff pattern:$0x75316420]
      %v368 = vld.sshfl [vmem:[#allocation1 + $0x8] sm:$0xff pattern:$0x75316420]
      %v369 = vld.sshfl [vmem:[#allocation1 + $0x10] sm:$0xff pattern:$0x75316420]
      %v370 = vld.sshfl [vmem:[#allocation1 + $0x18] sm:$0xff pattern:$0x75316420]
      %371 = vrot.lane.b32.xlu0 %v367, 110
      %v372 = vpop.permute.xlu0 %371
      %373 = vrot.lane.b32.xlu0 %v368, 110
      %v374 = vpop.permute.xlu0 %373
      %375 = vrot.lane.b32.xlu0 %v369, 110
      %v376 = vpop.permute.xlu0 %375
      %377 = vrot.lane.b32.xlu0 %v370, 110
      %v378 = vpop.permute.xlu0 %377
      %vm379 = vcmask 900096
      %v380 = vsel %vm379, %v372, %v374
      %v381 = vsel %vm379, %v374, %v376
      %v382 = vsel %vm379, %v376, %v378
      %386 = vst [vmem:[#allocation3 + $0x18] sm:$0xf0] %v380
      %387 = vst [vmem:[#allocation3 + $0x20] sm:$0xf0] %v381
      %388 = vst [vmem:[#allocation3 + $0x28] sm:$0xf0] %v382
      %v389 = vld [vmem:[#allocation2] sm:$0xff]
      %v390 = vunpack.c.l.bf16 %v389
      %v391 = vunpack.c.h.bf16 %v389
      %394 = vst [vmem:[#allocation1] ss:$2 sm:$0xff] %v390
      %s395 = scalar_lea.vmem [#allocation1], 16
      %396 = vst [vmem:[%s395] ss:$2 sm:$0xff] %v391
      %v397 = vld.sshfl [vmem:[#allocation1] sm:$0xff pattern:$0x75316420]
      %v398 = vld.sshfl [vmem:[#allocation1 + $0x8] sm:$0xff pattern:$0x75316420]
      %v399 = vld.sshfl [vmem:[#allocation1 + $0x10] sm:$0xff pattern:$0x75316420]
      %v400 = vld.sshfl [vmem:[#allocation1 + $0x18] sm:$0xff pattern:$0x75316420]
      %401 = vrot.lane.b32.xlu0 %v397, 109
      %v402 = vpop.permute.xlu0 %401
      %403 = vrot.lane.b32.xlu0 %v398, 109
      %v404 = vpop.permute.xlu0 %403
      %405 = vrot.lane.b32.xlu0 %v399, 109
      %v406 = vpop.permute.xlu0 %405
      %407 = vrot.lane.b32.xlu0 %v400, 109
      %v408 = vpop.permute.xlu0 %407
      %vm409 = vcmask 891904
      %v410 = vsel %vm409, %v402, %v404
      %v411 = vsel %vm409, %v404, %v406
      %v412 = vsel %vm409, %v406, %v408
      %416 = vst [vmem:[#allocation3 + $0x30] sm:$0xf] %v410
      %417 = vst [vmem:[#allocation3 + $0x38] sm:$0xf] %v411
      %418 = vst [vmem:[#allocation3 + $0x40] sm:$0xf] %v412
      %v419 = vld [vmem:[#allocation2] sm:$0xff]
      %v420 = vunpack.c.l.bf16 %v419
      %v421 = vunpack.c.h.bf16 %v419
      %s424 = scalar_lea.vmem [#allocation1], 1
      %425 = vst [vmem:[%s424] ss:$2 sm:$0xff] %v420
      %s426 = scalar_lea.vmem [#allocation1], 17
      %427 = vst [vmem:[%s426] ss:$2 sm:$0xff] %v421
      %v428 = vld.sshfl [vmem:[#allocation1] sm:$0xff pattern:$0x75316420]
      %v429 = vld.sshfl [vmem:[#allocation1 + $0x8] sm:$0xff pattern:$0x75316420]
      %v430 = vld.sshfl [vmem:[#allocation1 + $0x10] sm:$0xff pattern:$0x75316420]
      %v431 = vld.sshfl [vmem:[#allocation1 + $0x18] sm:$0xff pattern:$0x75316420]
      %432 = vrot.lane.b32.xlu0 %v428, 108
      %v433 = vpop.permute.xlu0 %432
      %434 = vrot.lane.b32.xlu0 %v429, 108
      %v435 = vpop.permute.xlu0 %434
      %436 = vrot.lane.b32.xlu0 %v430, 108
      %v437 = vpop.permute.xlu0 %436
      %438 = vrot.lane.b32.xlu0 %v431, 108
      %v439 = vpop.permute.xlu0 %438
      %vm440 = vcmask 883712
      %v441 = vsel %vm440, %v433, %v435
      %v442 = vsel %vm440, %v435, %v437
      %v443 = vsel %vm440, %v437, %v439
      %447 = vst [vmem:[#allocation3 + $0x30] sm:$0xf0] %v441
      %448 = vst [vmem:[#allocation3 + $0x38] sm:$0xf0] %v442
      %449 = vst [vmem:[#allocation3 + $0x40] sm:$0xf0] %v443
      %v450 = vld [vmem:[#allocation2] sm:$0xff]
      %v451 = vunpack.c.l.bf16 %v450
      %v452 = vunpack.c.h.bf16 %v450
      %455 = vst [vmem:[#allocation1] ss:$2 sm:$0xff] %v451
      %s456 = scalar_lea.vmem [#allocation1], 16
      %457 = vst [vmem:[%s456] ss:$2 sm:$0xff] %v452
      %v458 = vld.sshfl [vmem:[#allocation1] sm:$0xff pattern:$0x75316420]
      %v459 = vld.sshfl [vmem:[#allocation1 + $0x8] sm:$0xff pattern:$0x75316420]
      %v460 = vld.sshfl [vmem:[#allocation1 + $0x10] sm:$0xff pattern:$0x75316420]
      %v461 = vld.sshfl [vmem:[#allocation1 + $0x18] sm:$0xff pattern:$0x75316420]
      %462 = vrot.lane.b32.xlu0 %v458, 92
      %v463 = vpop.permute.xlu0 %462
      %464 = vrot.lane.b32.xlu0 %v459, 92
      %v465 = vpop.permute.xlu0 %464
      %466 = vrot.lane.b32.xlu0 %v460, 92
      %v467 = vpop.permute.xlu0 %466
      %468 = vrot.lane.b32.xlu0 %v461, 92
      %v469 = vpop.permute.xlu0 %468
      %vm470 = vcmask 752640
      %v471 = vsel %vm470, %v463, %v465
      %v472 = vsel %vm470, %v465, %v467
      %v473 = vsel %vm470, %v467, %v469
      %477 = vst [vmem:[#allocation3 + $0x48] sm:$0xf] %v471
      %478 = vst [vmem:[#allocation3 + $0x50] sm:$0xf] %v472
      %479 = vst [vmem:[#allocation3 + $0x58] sm:$0xf] %v473
      %v480 = vld [vmem:[#allocation2] sm:$0xff]
      %v481 = vunpack.c.l.bf16 %v480
      %v482 = vunpack.c.h.bf16 %v480
      %s485 = scalar_lea.vmem [#allocation1], 1
      %486 = vst [vmem:[%s485] ss:$2 sm:$0xff] %v481
      %s487 = scalar_lea.vmem [#allocation1], 17
      %488 = vst [vmem:[%s487] ss:$2 sm:$0xff] %v482
      %v489 = vld.sshfl [vmem:[#allocation1] sm:$0xff pattern:$0x75316420]
      %v490 = vld.sshfl [vmem:[#allocation1 + $0x8] sm:$0xff pattern:$0x75316420]
      %v491 = vld.sshfl [vmem:[#allocation1 + $0x10] sm:$0xff pattern:$0x75316420]
      %v492 = vld.sshfl [vmem:[#allocation1 + $0x18] sm:$0xff pattern:$0x75316420]
      %493 = vrot.lane.b32.xlu0 %v489, 91
      %v494 = vpop.permute.xlu0 %493
      %495 = vrot.lane.b32.xlu0 %v490, 91
      %v496 = vpop.permute.xlu0 %495
      %497 = vrot.lane.b32.xlu0 %v491, 91
      %v498 = vpop.permute.xlu0 %497
      %499 = vrot.lane.b32.xlu0 %v492, 91
      %v500 = vpop.permute.xlu0 %499
      %vm501 = vcmask 744448
      %v502 = vsel %vm501, %v494, %v496
      %v503 = vsel %vm501, %v496, %v498
      %v504 = vsel %vm501, %v498, %v500
      %508 = vst [vmem:[#allocation3 + $0x48] sm:$0xf0] %v502
      %509 = vst [vmem:[#allocation3 + $0x50] sm:$0xf0] %v503
      %510 = vst [vmem:[#allocation3 + $0x58] sm:$0xf0] %v504
      %v511 = vld [vmem:[#allocation2] sm:$0xff]
      %v512 = vunpack.c.l.bf16 %v511
      %v513 = vunpack.c.h.bf16 %v511
      %516 = vst [vmem:[#allocation1] ss:$2 sm:$0xff] %v512
      %s517 = scalar_lea.vmem [#allocation1], 16
      %518 = vst [vmem:[%s517] ss:$2 sm:$0xff] %v513
      %v519 = vld.sshfl [vmem:[#allocation1] sm:$0xff pattern:$0x75316420]
      %v520 = vld.sshfl [vmem:[#allocation1 + $0x8] sm:$0xff pattern:$0x75316420]
      %v521 = vld.sshfl [vmem:[#allocation1 + $0x10] sm:$0xff pattern:$0x75316420]
      %v522 = vld.sshfl [vmem:[#allocation1 + $0x18] sm:$0xff pattern:$0x75316420]
      %523 = vrot.lane.b32.xlu0 %v519, 90
      %v524 = vpop.permute.xlu0 %523
      %525 = vrot.lane.b32.xlu0 %v520, 90
      %v526 = vpop.permute.xlu0 %525
      %527 = vrot.lane.b32.xlu0 %v521, 90
      %v528 = vpop.permute.xlu0 %527
      %529 = vrot.lane.b32.xlu0 %v522, 90
      %v530 = vpop.permute.xlu0 %529
      %vm531 = vcmask 736256
      %v532 = vsel %vm531, %v524, %v526
      %v533 = vsel %vm531, %v526, %v528
      %v534 = vsel %vm531, %v528, %v530
      %538 = vst [vmem:[#allocation3 + $0x60] sm:$0xf] %v532
      %539 = vst [vmem:[#allocation3 + $0x68] sm:$0xf] %v533
      %540 = vst [vmem:[#allocation3 + $0x70] sm:$0xf] %v534
      %v541 = vld [vmem:[%s2] sm:$0xf]
      %v542 = vld [vmem:[#allocation3] sm:$0xff]
      %v543 = vld [vmem:[#allocation3 + $0x8] sm:$0xff]
      %v544 = vld [vmem:[#allocation3 + $0x10] sm:$0xff]
      %v545 = vld [vmem:[#allocation3 + $0x18] sm:$0xff]
      %v546 = vld [vmem:[#allocation3 + $0x20] sm:$0xff]
      %v547 = vld [vmem:[#allocation3 + $0x28] sm:$0xff]
      %v548 = vld [vmem:[#allocation3 + $0x30] sm:$0xff]
      %v549 = vld [vmem:[#allocation3 + $0x38] sm:$0xff]
      %v550 = vld [vmem:[#allocation3 + $0x40] sm:$0xff]
      %v551 = vld [vmem:[#allocation3 + $0x48] sm:$0xff]
      %v552 = vld [vmem:[#allocation3 + $0x50] sm:$0xff]
      %v553 = vld [vmem:[#allocation3 + $0x58] sm:$0xff]
      %v554 = vld [vmem:[#allocation3 + $0x60] sm:$0xf]
      %v555 = vld [vmem:[#allocation3 + $0x68] sm:$0xf]
      %v556 = vld [vmem:[#allocation3 + $0x70] sm:$0xf]
      %v557 = vpack.c.bf16 %v545, %v542
      %v558 = vpack.c.bf16 %v546, %v543
      %v559 = vpack.c.bf16 %v547, %v544
      %v560 = vpack.c.bf16 %v551, %v548
      %v561 = vpack.c.bf16 %v552, %v549
      %v562 = vpack.c.bf16 %v553, %v550
      %v563 = vpack.c.bf16 %v554, %v554
      %v564 = vpack.c.bf16 %v555, %v555
      %v565 = vpack.c.bf16 %v556, %v556
      %vm566 = vcmask 293888
      %v568 = vsel %vm566, %v541, 0
      %vm570 = vcmask 1041408
      %v572 = vsel %vm570, %v563, 0
      %v575 = vsel %vm570, %v564, 0
      %v578 = vsel %vm570, %v565, 0
      %580 = vmatpush.bf16.msra.mxu0 0
      %581 = vmatpush.bf16.msra.mxu0 0
      %582 = vmatpush.bf16.msra.mxu0 0
      %583 = vmatpush.bf16.msra.mxu0 0
      %584 = vmatpush.bf16.msra.mxu0 0
      %585 = vmatpush.bf16.msra.mxu0 %v572
      %586 = vmatpush.bf16.msra.mxu0 %v560
      %587 = vmatpush.bf16.msra.mxu0 %v557
      %588 = vmatmul.bf16.gmra.mxu0 %v568
      %v589 = vpop.f32.mrf.mxu0
      %v590 = vadd.f32 0.0, %v589
      %v591 = vpop.f32.mrf.mxu0
      %592 = vdwg.mxu0
      %593 = vmatpush.bf16.msra.mxu0 0
      %594 = vmatpush.bf16.msra.mxu0 0
      %595 = vmatpush.bf16.msra.mxu0 0
      %596 = vmatpush.bf16.msra.mxu0 0
      %597 = vmatpush.bf16.msra.mxu0 0
      %598 = vmatpush.bf16.msra.mxu0 %v575
      %599 = vmatpush.bf16.msra.mxu0 %v561
      %600 = vmatpush.bf16.msra.mxu0 %v558
      %601 = vmatmul.bf16.gmra.mxu0 %v568
      %v602 = vpop.f32.mrf.mxu0
      %v603 = vadd.f32 0.0, %v602
      %v604 = vpop.f32.mrf.mxu0
      %605 = vdwg.mxu0
      %606 = vmatpush.bf16.msra.mxu0 0
      %607 = vmatpush.bf16.msra.mxu0 0
      %608 = vmatpush.bf16.msra.mxu0 0
      %609 = vmatpush.bf16.msra.mxu0 0
      %610 = vmatpush.bf16.msra.mxu0 0
      %611 = vmatpush.bf16.msra.mxu0 %v578
      %612 = vmatpush.bf16.msra.mxu0 %v562
      %613 = vmatpush.bf16.msra.mxu0 %v559
      %614 = vmatmul.bf16.gmra.mxu0 %v568
      %v615 = vpop.f32.mrf.mxu0
      %v616 = vadd.f32 0.0, %v615
      %v617 = vpop.f32.mrf.mxu0
      %618 = vdwg.mxu0
      %v619 = vmax.f32 %v590, 0.0
      %v620 = vmax.f32 %v603, 0.0
      %v621 = vmax.f32 %v616, 0.0
      %622 = vst [vmem:[%s273] sm:$0xff] %v619
      %623 = vst [vmem:[%s273 + $0x8] sm:$0xff] %v620
      %624 = vst [vmem:[%s273 + $0x10] sm:$0xff] %v621
      %s625 = smul.u32 3, %s19
      %p626 = scmp.lt.s32.totalorder %s18, 1
      %s627 = scalar_select %p626, %s18, 1
      %p628 = scmp.lt.s32.totalorder %s625, 2
      %s629 = scalar_select %p628, %s625, 2
      %s630 = smul.addr %s627, 3
      %s631 = sadd.s32 %s629, %s630
      %s632 = smul.addr %s631, 8
      %s633 = scalar_lea.vmem %s3, %s632
      // Predicated region
      $region33: #{basic_conv_do_eval.1} parent=31 // pred_check
        %p634 = pneg %p127
      $region34: #{basic_conv_do_eval.1} parent=31 // pred_check_branch
        %636 = sbr.rel (%p634) target = $region36
      $region35: #{basic_conv_do_eval.1} parent=31 // pred_region
        %s637 = smul.u32 3, %s19
      $region36: #{basic_conv_do_eval.1} parent=31 // pred_fallthru
        _
    $region32: #{basic_conv_do_eval.1} parent=5 // pred_fallthru
      _
    %p638 = scmp.le.s32.totalorder 2, %s9
    // Predicated region
    $region37: #{basic_conv_do_eval.1} parent=5 // pred_check
      %p639 = pneg %p638
    $region38: #{basic_conv_do_eval.1} parent=5 // pred_check_branch
      %641 = sbr.rel (%p639) target = $region40
    $region39: #{basic_conv_do_eval.1} parent=5 // pred_region
      %s642 = ssub.s32 %s9, 2
      // Predicated region
      $region41: #{basic_conv_do_eval.1} parent=39 // pred_check
        %p643 = pneg %p133
      $region42: #{basic_conv_do_eval.1} parent=39 // pred_check_branch
        %645 = sbr.rel (%p643) target = $region44
      $region43: #{basic_conv_do_eval.1} parent=39 // pred_region
        %s646 = smul.u32 3, %s21
        %p647 = scmp.lt.s32.totalorder %s20, 1
        %s648 = scalar_select %p647, %s20, 1
        %p649 = scmp.lt.s32.totalorder %s646, 2
        %s650 = scalar_select %p649, %s646, 2
        %s651 = smul.addr %s648, 3
        %s652 = sadd.s32 %s650, %s651
        %s653 = smul.addr %s652, 8
        %s654 = scalar_lea.vmem %s3, %s653
      $region44: #{basic_conv_do_eval.1} parent=39 // pred_fallthru
        _
    $region40: #{basic_conv_do_eval.1} parent=5 // pred_fallthru
      _
  $region6: #{basic_conv_do_eval.1} parent=0 // loop_footer
    %s13 = sadd.s32 1, %s9
  $region7: #{basic_conv_do_eval.1} parent=0 // loop_footer_branch
    %8 = sbr.rel target = $region3
  $region8: #{basic_conv_do_eval.1} parent=0 // loop_exit
    _

</llo_original>
